<compile_context>
chip_gen: v6e
topology: v6e:2x2x1
jax: 0.10.0
libtpu: 0.0.40
codegen_flags: <defaults>
</compile_context>

<pallas_src>
import functools

import jax
import jax.numpy as jnp
import numpy as np
from jax.experimental import pallas as pl
from jax.experimental.pallas import tpu as pltpu


# Target per-block working set in *elements* (~4 MiB of f32). This lands in the
# recommended 2-4 MiB (v5e) / 4-8 MiB (v6e) / 4-6 MiB (v7x) per-block range.
_TARGET_BLOCK_ELEMS = 1 << 20
_MEGACORE_SPLIT_MIN_BYTES = 512 * 1024  # only split 1-block grids above this


def _itemsize(dtype):
    return np.dtype(dtype).itemsize


def _round_up(x, m):
    return ((x + m - 1) // m) * m


def _largest_divisor_leq(n, k):
    k = max(1, min(n, k))
    for d in range(k, 0, -1):
        if n % d == 0:
            return d
    return 1


def _vmem_capacity_bytes():
    """Physical VMEM per TensorCore; conservative fallback if query fails."""
    try:
        return int(pltpu.get_tpu_info().vmem_capacity_bytes)
    except Exception:
        return 64 * 1024 * 1024  # v7x-sized (the smallest of v5e/v6e/v7x)


def _compiler_params(dim_semantics, block_elems, io_itemsize, wb_bytes):
    cap = _vmem_capacity_bytes()
    need = (
        4 * block_elems * io_itemsize   # 2 input + 2 output pipelined buffers
        + 4 * block_elems * 4           # in-kernel f32 temporaries
        + 4 * wb_bytes                  # double-buffered weight + bias blocks
        + (4 << 20)                     # slack
    )
    limit = int(min(max(need, 32 << 20), (cap * 3) // 4))
    return pltpu.CompilerParams(
        dimension_semantics=dim_semantics,
        vmem_limit_bytes=limit,
    )


# --------------------------------------------------------------------------
# channels_first kernel: block is [TB, C, T]  (T = spatial tile on lanes,
# C on sublanes). Normalize over axis=1 (C). weight/bias come in lane-dense
# [C, T] (or [C, 1] for very large C) and broadcast over the batch tile.
# --------------------------------------------------------------------------
def _ln_channels_first_kernel(x_ref, w_ref, b_ref, o_ref, *, eps):
    x = x_ref[...].astype(jnp.float32)                  # [TB, C, T]
    u = jnp.mean(x, axis=1, keepdims=True)              # [TB, 1, T]
    d = x - u
    # Two-pass centered moment kept on purpose (robust to large-mean inputs).
    s = jnp.mean(d * d, axis=1, keepdims=True)          # [TB, 1, T] biased var
    y = d * jax.lax.rsqrt(s + eps)                       # [TB, C, T]
    w = w_ref[...].astype(jnp.float32)                   # [C, T] or [C, 1]
    b = b_ref[...].astype(jnp.float32)
    o_ref[...] = (w[None] * y + b[None]).astype(o_ref.dtype)


def _cf_tiles(B, C, HW):
    """Pick (TB, THW) so TB*C*THW ~= _TARGET_BLOCK_ELEMS, layout-legal."""
    max_lanes = max(1, _TARGET_BLOCK_ELEMS // C)
    if HW <= max_lanes:
        t_hw = HW                                        # full extent: legal
        tb_want = max(1, _TARGET_BLOCK_ELEMS // (C * HW))
        t_b = _largest_divisor_leq(B, tb_want)           # exact batch grid
    else:
        t_b = 1
        t_hw = max(128, (max_lanes // 128) * 128)         # 128-multiple lanes
        if t_hw >= HW:
            t_hw = HW
    return t_b, t_hw


def _maybe_split_cf(B, C, HW, t_b, t_hw, itemsize):
    """Guarantee >=2 'parallel' blocks for v7x's two TensorCores when worth it."""
    n_blocks = (B // t_b) * pl.cdiv(HW, t_hw)
    if n_blocks >= 2 or B * C * HW * itemsize < _MEGACORE_SPLIT_MIN_BYTES:
        return t_b, t_hw
    if B >= 2:
        d = _largest_divisor_leq(B, max(1, B // 2))
        if d < B:
            return d, t_hw
    if HW >= 256:
        half = _round_up(pl.cdiv(HW, 2), 128)
        if half < HW:
            return t_b, half
    return t_b, t_hw


def layer_norm_channels_first(x, weight, bias, *, eps=1e-6):
    """x: [B, C, H, W], weight/bias: [C] -> [B, C, H, W]."""
    B, C, H, W = x.shape
    HW = H * W
    x3 = x.reshape(B, C, HW)
    isz = _itemsize(x.dtype)

    t_b, t_hw = _cf_tiles(B, C, HW)
    t_b, t_hw = _maybe_split_cf(B, C, HW, t_b, t_hw, isz)
    n_b = B // t_b
    n_hw = pl.cdiv(HW, t_hw)

    # Lane-dense weight/bias (removes in-kernel lane broadcast) when cheap;
    # fall back to [C, 1] columns for very large C to bound VMEM.
    w_isz = _itemsize(weight.dtype)
    if C * t_hw * w_isz <= (2 << 20):
        w2 = jnp.broadcast_to(weight.reshape(C, 1), (C, t_hw))
        b2 = jnp.broadcast_to(bias.reshape(C, 1), (C, t_hw))
        w_block = (C, t_hw)
    else:
        w2 = weight.reshape(C, 1)
        b2 = bias.reshape(C, 1)
        w_block = (C, 1)

    block_elems = t_b * C * t_hw
    wb_bytes = (w2.size + b2.size) * w_isz
    numel = B * C * HW
    cost = pl.CostEstimate(
        flops=8 * numel,
        transcendentals=B * HW,            # one rsqrt per normalized column
        bytes_accessed=2 * numel * isz + 2 * wb_bytes,
    )

    kernel = functools.partial(_ln_channels_first_kernel, eps=eps)
    out = pl.pallas_call(
        kernel,
        out_shape=jax.ShapeDtypeStruct((B, C, HW), x.dtype),
        grid=(n_b, n_hw),
        in_specs=[
            pl.BlockSpec((t_b, C, t_hw), lambda b, t: (b, 0, t)),
            pl.BlockSpec(w_block, lambda b, t: (0, 0)),
            pl.BlockSpec(w_block, lambda b, t: (0, 0)),
        ],
        out_specs=pl.BlockSpec((t_b, C, t_hw), lambda b, t: (b, 0, t)),
        compiler_params=_compiler_params(
            ("parallel", "parallel"), block_elems, isz, wb_bytes),
        cost_estimate=cost,
    )(x3, w2, b2)
    return out.reshape(B, C, H, W)


# --------------------------------------------------------------------------
# channels_last kernel: block is [TR, C] (C on lanes), normalize over lanes.
# Note: when C < 128 the output is lane-sparse (masked vst stores, ~2x store
# inefficiency); for hot small-C cases prefer the channels_first layout or
# fuse with adjacent ops. For C that is a multiple of 128 this path is optimal.
# --------------------------------------------------------------------------
def _ln_channels_last_kernel(x_ref, w_ref, b_ref, o_ref, *, eps):
    x = x_ref[...].astype(jnp.float32)                   # [TR, C]
    u = jnp.mean(x, axis=-1, keepdims=True)              # [TR, 1]
    d = x - u
    s = jnp.mean(d * d, axis=-1, keepdims=True)          # [TR, 1] biased var
    y = d * jax.lax.rsqrt(s + eps)                        # [TR, C]
    w = w_ref[...].astype(jnp.float32)                    # [1, C]
    b = b_ref[...].astype(jnp.float32)                    # [1, C]
    o_ref[...] = (y * w + b).astype(o_ref.dtype)


def _cl_tiles(N, C):
    rows_want = max(1, _TARGET_BLOCK_ELEMS // C)
    if rows_want >= N:
        return N                                          # full extent: legal
    t_rows = max(8, (rows_want // 8) * 8)                 # 8-multiple sublanes
    return min(t_rows, N)


def _maybe_split_cl(N, C, t_rows, itemsize):
    if pl.cdiv(N, t_rows) >= 2 or N * C * itemsize < _MEGACORE_SPLIT_MIN_BYTES:
        return t_rows
    if N >= 16:
        half = _round_up(pl.cdiv(N, 2), 8)
        if half < N:
            return half
    return t_rows


def layer_norm_channels_last(x, weight, bias, *, eps=1e-6):
    """x: [..., C], weight/bias: [C] -> same shape as x."""
    C = x.shape[-1]
    orig_shape = x.shape
    x2 = x.reshape(-1, C)
    N = x2.shape[0]
    isz = _itemsize(x.dtype)
    w_isz = _itemsize(weight.dtype)

    t_rows = _cl_tiles(N, C)
    t_rows = _maybe_split_cl(N, C, t_rows, isz)
    n_rows = pl.cdiv(N, t_rows)

    w2 = weight.reshape(1, C)
    b2 = bias.reshape(1, C)

    block_elems = t_rows * C
    wb_bytes = 2 * C * w_isz
    numel = N * C
    cost = pl.CostEstimate(
        flops=8 * numel,
        transcendentals=N,                 # one rsqrt per row
        bytes_accessed=2 * numel * isz + 2 * wb_bytes,
    )

    kernel = functools.partial(_ln_channels_last_kernel, eps=eps)
    out = pl.pallas_call(
        kernel,
        out_shape=jax.ShapeDtypeStruct((N, C), x.dtype),
        grid=(n_rows,),
        in_specs=[
            pl.BlockSpec((t_rows, C), lambda i: (i, 0)),
            pl.BlockSpec((1, C), lambda i: (0, 0)),
            pl.BlockSpec((1, C), lambda i: (0, 0)),
        ],
        out_specs=pl.BlockSpec((t_rows, C), lambda i: (i, 0)),
        compiler_params=_compiler_params(
            ("parallel",), block_elems, isz, wb_bytes),
        cost_estimate=cost,
    )(x2, w2, b2)
    return out.reshape(orig_shape)


def layer_norm(x, weight, bias, *, eps=1e-6, data_format="channels_first"):
    """Pallas equivalent of the PyTorch LayerNorm module's forward()."""
    if data_format == "channels_first":
        return layer_norm_channels_first(x, weight, bias, eps=eps)
    elif data_format == "channels_last":
        return layer_norm_channels_last(x, weight, bias, eps=eps)
    raise NotImplementedError(data_format)


# --------------------------------------------------------------------------
# Pure-JAX reference (mirrors the PyTorch forward exactly)
# --------------------------------------------------------------------------
def _ref_layer_norm(x, weight, bias, eps, data_format):
    if data_format == "channels_last":
        u = jnp.mean(x, axis=-1, keepdims=True)
        s = jnp.mean((x - u) ** 2, axis=-1, keepdims=True)
        y = (x - u) / jnp.sqrt(s + eps)
        return y * weight + bias
    else:  # channels_first
        u = jnp.mean(x, axis=1, keepdims=True)
        s = jnp.mean((x - u) ** 2, axis=1, keepdims=True)
        y = (x - u) / jnp.sqrt(s + eps)
        return weight[None, :, None, None] * y + bias[None, :, None, None]


if __name__ == "__main__":
    B, C, H, W = 2, 64, 16, 16
    eps = 1e-6

    key = jax.random.PRNGKey(0)
    k_cf, k_cl, k_w, k_b = jax.random.split(key, 4)

    weight = 1.0 + 0.05 * jax.random.normal(k_w, (C,), jnp.float32)
    bias = 0.1 * jax.random.normal(k_b, (C,), jnp.float32)

    # channels_first: [B, C, H, W]
    x_cf = jax.random.normal(k_cf, (B, C, H, W), jnp.float32)
    out_cf = jax.block_until_ready(
        layer_norm(x_cf, weight, bias, eps=eps, data_format="channels_first"))
    assert out_cf.shape == (B, C, H, W)
    ref_cf = _ref_layer_norm(x_cf, weight, bias, eps, "channels_first")
    np.testing.assert_allclose(np.asarray(out_cf), np.asarray(ref_cf),
                               rtol=2e-4, atol=2e-4)

    # channels_last: [B, H, W, C]
    x_cl = jax.random.normal(k_cl, (B, H, W, C), jnp.float32)
    out_cl = jax.block_until_ready(
        layer_norm(x_cl, weight, bias, eps=eps, data_format="channels_last"))
    assert out_cl.shape == (B, H, W, C)
    ref_cl = _ref_layer_norm(x_cl, weight, bias, eps, "channels_last")
    np.testing.assert_allclose(np.asarray(out_cl), np.asarray(ref_cl),
                               rtol=2e-4, atol=2e-4)

    print("KERNEL_OK")
</pallas_src>

<mosaic_0001>
module attributes {stable_mosaic.version = 11 : i64} {
  func.func @_ln_channels_first_kernel(%arg0: i32, %arg1: i32, %arg2: memref<2x64x256xf32, #tpu.memory_space<vmem>>, %arg3: memref<64x256xf32, #tpu.memory_space<vmem>>, %arg4: memref<64x256xf32, #tpu.memory_space<vmem>>, %arg5: memref<2x64x256xf32, #tpu.memory_space<vmem>>) attributes {dimension_semantics = [#tpu.dimension_semantics<parallel>, #tpu.dimension_semantics<parallel>], iteration_bounds = array<i64: 1, 1>, scalar_prefetch = 0 : i64, scratch_operands = 0 : i64, tpu.core_type = #tpu.core_type<tc>, window_params = [{transform_indices = @transform_0, window_bounds = array<i64: 2, 64, 256>}, {pipeline_mode = #tpu.pipeline_mode<synchronous>, transform_indices = @transform_1, window_bounds = array<i64: 64, 256>}, {pipeline_mode = #tpu.pipeline_mode<synchronous>, transform_indices = @transform_2, window_bounds = array<i64: 64, 256>}, {transform_indices = @transform_3, window_bounds = array<i64: 2, 64, 256>}]} {
    %c0 = arith.constant 0 : index
    %c0_0 = arith.constant 0 : index
    %c0_1 = arith.constant 0 : index
    %0 = vector.load %arg2[%c0, %c0_0, %c0_1] : memref<2x64x256xf32, #tpu.memory_space<vmem>>, vector<2x64x256xf32>
    %cst = arith.constant dense<0.000000e+00> : vector<2x256xf32>
    %1 = vector.multi_reduction <add>, %0, %cst [1] : vector<2x64x256xf32> to vector<2x256xf32>
    %2 = vector.shape_cast %1 : vector<2x256xf32> to vector<2x1x256xf32>
    %cst_2 = arith.constant 6.400000e+01 : f32
    %3 = vector.broadcast %cst_2 : f32 to vector<2x1x256xf32>
    %4 = arith.divf %2, %3 : vector<2x1x256xf32>
    %5 = vector.broadcast %4 : vector<2x1x256xf32> to vector<2x64x256xf32>
    %6 = arith.subf %0, %5 : vector<2x64x256xf32>
    %7 = arith.mulf %6, %6 : vector<2x64x256xf32>
    %cst_3 = arith.constant dense<0.000000e+00> : vector<2x256xf32>
    %8 = vector.multi_reduction <add>, %7, %cst_3 [1] : vector<2x64x256xf32> to vector<2x256xf32>
    %9 = vector.shape_cast %8 : vector<2x256xf32> to vector<2x1x256xf32>
    %cst_4 = arith.constant 6.400000e+01 : f32
    %10 = vector.broadcast %cst_4 : f32 to vector<2x1x256xf32>
    %11 = arith.divf %9, %10 : vector<2x1x256xf32>
    %cst_5 = arith.constant 9.99999997E-7 : f32
    %12 = vector.broadcast %cst_5 : f32 to vector<2x1x256xf32>
    %13 = arith.addf %11, %12 : vector<2x1x256xf32>
    %14 = math.rsqrt %13 : vector<2x1x256xf32>
    %15 = vector.broadcast %14 : vector<2x1x256xf32> to vector<2x64x256xf32>
    %16 = arith.mulf %6, %15 : vector<2x64x256xf32>
    %c0_6 = arith.constant 0 : index
    %c0_7 = arith.constant 0 : index
    %17 = vector.load %arg3[%c0_6, %c0_7] : memref<64x256xf32, #tpu.memory_space<vmem>>, vector<64x256xf32>
    %c0_8 = arith.constant 0 : index
    %c0_9 = arith.constant 0 : index
    %18 = vector.load %arg4[%c0_8, %c0_9] : memref<64x256xf32, #tpu.memory_space<vmem>>, vector<64x256xf32>
    %19 = vector.shape_cast %17 : vector<64x256xf32> to vector<1x64x256xf32>
    %20 = vector.broadcast %19 : vector<1x64x256xf32> to vector<2x64x256xf32>
    %21 = arith.mulf %20, %16 : vector<2x64x256xf32>
    %22 = vector.shape_cast %18 : vector<64x256xf32> to vector<1x64x256xf32>
    %23 = vector.broadcast %22 : vector<1x64x256xf32> to vector<2x64x256xf32>
    %24 = arith.addf %21, %23 : vector<2x64x256xf32>
    %c0_10 = arith.constant 0 : index
    %c0_11 = arith.constant 0 : index
    %c0_12 = arith.constant 0 : index
    %25 = vector.load %arg5[%c0_10, %c0_11, %c0_12] : memref<2x64x256xf32, #tpu.memory_space<vmem>>, vector<2x64x256xf32>
    tpu.vector_store %arg5[%c0_10, %c0_11, %c0_12], %24 {strides = array<i32>} : memref<2x64x256xf32, #tpu.memory_space<vmem>>, vector<2x64x256xf32>,
    return
  }
  func.func @transform_0(%arg0: i32, %arg1: i32) -> (i32, i32, i32) {
    %c0_i32 = arith.constant 0 : i32
    %c0_i32_0 = arith.constant 0 : i32
    return %arg0, %c0_i32, %arg1 : i32, i32, i32
  }
  func.func @transform_1(%arg0: i32, %arg1: i32) -> (i32, i32) {
    %c0_i32 = arith.constant 0 : i32
    %c0_i32_0 = arith.constant 0 : i32
    %c0_i32_1 = arith.constant 0 : i32
    return %c0_i32, %c0_i32_0 : i32, i32
  }
  func.func @transform_2(%arg0: i32, %arg1: i32) -> (i32, i32) {
    %c0_i32 = arith.constant 0 : i32
    %c0_i32_0 = arith.constant 0 : i32
    %c0_i32_1 = arith.constant 0 : i32
    return %c0_i32, %c0_i32_0 : i32, i32
  }
  func.func @transform_3(%arg0: i32, %arg1: i32) -> (i32, i32, i32) {
    %c0_i32 = arith.constant 0 : i32
    %c0_i32_0 = arith.constant 0 : i32
    return %arg0, %c0_i32, %arg1 : i32, i32, i32
  }
}

</mosaic_0001>

<llo_original>
// kernel: tpu_custom_call.1
$region0: #{tpu_custom_call.1}
  #allocation0 [shape = 'u32[]', space=smem, size = 0x4, offset = 0x4, fixed_abs, tag = 'smem constant byte address 0x4 - core index']
  #allocation1 [shape = 'u32[144,128]{1,0:T(1,128)}', space=vmem, size = 0x12000, scoped, tag = 'internal scratch']
  %s0 = inlined_call_operand.hbm [shape: f32[2,64,256], index: 0, kind: input, shape index: {}]
  %s1 = inlined_call_operand.hbm [shape: f32[64,256], index: 1, kind: input, shape index: {}]
  %s2 = inlined_call_operand.hbm [shape: f32[64,256], index: 2, kind: input, shape index: {}]
  %s3 = inlined_call_operand.hbm [shape: f32[2,64,256], index: 3, kind: output, shape index: {}]
  %s4 = sld [smem:[#allocation0]]
  $region34: #{tpu_custom_call.1} parent=0
    _
  %s6 = ssub.s32 1, %s4
  %s7 = scalar_select 0, %s6, %s4
  $region1: #{tpu_custom_call.1} parent=0
    #allocation2 [shape = 'u8[131072]{0}', space=vmem, size = 0x20000, scoped, tag = 'input window, operand 0, single buffered']
    #allocation3 [shape = 's32[1]{0}', space=sflag, size = 0x4, scoped, tag = 'scoped memory for tpu_custom_call.1']
    #allocation4 [shape = 's32[1]{0}', space=sflag, size = 0x4, scoped, tag = 'scoped memory for tpu_custom_call.1']
    #allocation5 [shape = 'u8[65536]{0}', space=vmem, size = 0x10000, scoped, tag = 'input window, operand 1, single buffered']
    #allocation6 [shape = 's32[1]{0}', space=sflag, size = 0x4, scoped, tag = 'scoped memory for tpu_custom_call.1']
    #allocation7 [shape = 'u8[65536]{0}', space=vmem, size = 0x10000, scoped, tag = 'input window, operand 2, single buffered']
    #allocation8 [shape = 'u8[131072]{0}', space=vmem, size = 0x20000, scoped, tag = 'output window, operand 0, single buffered']
    %8 = vsyncpa [#allocation3], 0
    %9 = vsyncpa [#allocation6], 0
    %10 = vsyncpa [#allocation4], 0
    // Predicated region
    $region2: #{tpu_custom_call.1} parent=1 // pred_check
      _
    $region3: #{tpu_custom_call.1} parent=1 // pred_check_branch
      %12 = sbr.rel (0) target = $region5
    $region4: #{tpu_custom_call.1} parent=1 // pred_region
      %s14 = ssub.s32 4096, 4096
      %15 = vsyncadd [#allocation3], %s14
      %s16 = sshll.u32 [#allocation2], 4
      %s17 = int_to_ptr.vmem [resolvable:$true] %s16
      %22 = dma.hbm_to_vmem [thread:$0]  %s0, 4096, %s17, [#allocation3], 256, 256, 16
    $region5: #{tpu_custom_call.1} parent=1 // pred_fallthru
      _
    // Predicated region
    $region6: #{tpu_custom_call.1} parent=1 // pred_check
      _
    $region7: #{tpu_custom_call.1} parent=1 // pred_check_branch
      %24 = sbr.rel (0) target = $region9
    $region8: #{tpu_custom_call.1} parent=1 // pred_region
      %s26 = ssub.s32 2048, 2048
      %27 = vsyncadd [#allocation6], %s26
      %s28 = sshll.u32 [#allocation5], 4
      %s29 = int_to_ptr.vmem [resolvable:$true] %s28
      %34 = dma.hbm_to_vmem [thread:$0]  %s1, 2048, %s29, [#allocation6], 256, 256, 16
    $region9: #{tpu_custom_call.1} parent=1 // pred_fallthru
      _
    // Predicated region
    $region10: #{tpu_custom_call.1} parent=1 // pred_check
      _
    $region11: #{tpu_custom_call.1} parent=1 // pred_check_branch
      %36 = sbr.rel (0) target = $region13
    $region12: #{tpu_custom_call.1} parent=1 // pred_region
      %s38 = ssub.s32 2048, 2048
      %39 = vsyncadd [#allocation6], %s38
      %s40 = sshll.u32 [#allocation7], 4
      %s41 = int_to_ptr.vmem [resolvable:$true] %s40
      %46 = dma.hbm_to_vmem [thread:$0]  %s2, 2048, %s41, [#allocation6], 256, 256, 16
    $region13: #{tpu_custom_call.1} parent=1 // pred_fallthru
      _
    // Predicated region
    $region14: #{tpu_custom_call.1} parent=1 // pred_check
      _
    $region15: #{tpu_custom_call.1} parent=1 // pred_check_branch
      %48 = sbr.rel (0) target = $region17
    $region16: #{tpu_custom_call.1} parent=1 // pred_region
      %49 = dma.done [#allocation3], 4096
    $region17: #{tpu_custom_call.1} parent=1 // pred_fallthru
      _
    // Predicated region
    $region18: #{tpu_custom_call.1} parent=1 // pred_check
      _
    $region19: #{tpu_custom_call.1} parent=1 // pred_check_branch
      %51 = sbr.rel (0) target = $region21
    $region20: #{tpu_custom_call.1} parent=1 // pred_region
      %52 = dma.done [#allocation6], 2048
    $region21: #{tpu_custom_call.1} parent=1 // pred_fallthru
      _
    // Predicated region
    $region22: #{tpu_custom_call.1} parent=1 // pred_check
      _
    $region23: #{tpu_custom_call.1} parent=1 // pred_check_branch
      %54 = sbr.rel (0) target = $region25
    $region24: #{tpu_custom_call.1} parent=1 // pred_region
      %55 = dma.done [#allocation6], 2048
    $region25: #{tpu_custom_call.1} parent=1 // pred_fallthru
      _
    %v56 = vld [vmem:[#allocation2] sm:$0xff]
    %v57 = vld [vmem:[#allocation2 + $0x8] sm:$0xff]
    %v58 = vld [vmem:[#allocation2 + $0x10] sm:$0xff]
    %v59 = vld [vmem:[#allocation2 + $0x18] sm:$0xff]
    %v60 = vld [vmem:[#allocation2 + $0x20] sm:$0xff]
    %v61 = vld [vmem:[#allocation2 + $0x28] sm:$0xff]
    %v62 = vld [vmem:[#allocation2 + $0x30] sm:$0xff]
    %v63 = vld [vmem:[#allocation2 + $0x38] sm:$0xff]
    %v64 = vld [vmem:[#allocation2 + $0x40] sm:$0xff]
    %v65 = vld [vmem:[#allocation2 + $0x48] sm:$0xff]
    %v66 = vld [vmem:[#allocation2 + $0x50] sm:$0xff]
    %v67 = vld [vmem:[#allocation2 + $0x58] sm:$0xff]
    %v68 = vld [vmem:[#allocation2 + $0x60] sm:$0xff]
    %v69 = vld [vmem:[#allocation2 + $0x68] sm:$0xff]
    %v70 = vld [vmem:[#allocation2 + $0x70] sm:$0xff]
    %v71 = vld [vmem:[#allocation2 + $0x78] sm:$0xff]
    %v72 = vld [vmem:[#allocation2 + $0x80] sm:$0xff]
    %v73 = vld [vmem:[#allocation2 + $0x88] sm:$0xff]
    %v74 = vld [vmem:[#allocation2 + $0x90] sm:$0xff]
    %v75 = vld [vmem:[#allocation2 + $0x98] sm:$0xff]
    %v76 = vld [vmem:[#allocation2 + $0xa0] sm:$0xff]
    %v77 = vld [vmem:[#allocation2 + $0xa8] sm:$0xff]
    %v78 = vld [vmem:[#allocation2 + $0xb0] sm:$0xff]
    %v79 = vld [vmem:[#allocation2 + $0xb8] sm:$0xff]
    %v80 = vld [vmem:[#allocation2 + $0xc0] sm:$0xff]
    %v81 = vld [vmem:[#allocation2 + $0xc8] sm:$0xff]
    %v82 = vld [vmem:[#allocation2 + $0xd0] sm:$0xff]
    %v83 = vld [vmem:[#allocation2 + $0xd8] sm:$0xff]
    %v84 = vld [vmem:[#allocation2 + $0xe0] sm:$0xff]
    %v85 = vld [vmem:[#allocation2 + $0xe8] sm:$0xff]
    %v86 = vld [vmem:[#allocation2 + $0xf0] sm:$0xff]
    %v87 = vld [vmem:[#allocation2 + $0xf8] sm:$0xff]
    %v88 = vadd.f32 %v56, %v58
    %v89 = vadd.f32 %v88, %v60
    %v90 = vadd.f32 %v89, %v62
    %v91 = vadd.f32 %v90, %v64
    %v92 = vadd.f32 %v91, %v66
    %v93 = vadd.f32 %v92, %v68
    %v94 = vadd.f32 %v93, %v70
    %v95 = vrot.slane %v94, 4
    %v96 = vadd.f32 %v94, %v95
    %v97 = vrot.slane %v96, 2
    %v98 = vadd.f32 %v96, %v97
    %v99 = vrot.slane %v98, 1
    %v100 = vadd.f32 %v98, %v99
    %v101 = vadd.f32 %v57, %v59
    %v102 = vadd.f32 %v101, %v61
    %v103 = vadd.f32 %v102, %v63
    %v104 = vadd.f32 %v103, %v65
    %v105 = vadd.f32 %v104, %v67
    %v106 = vadd.f32 %v105, %v69
    %v107 = vadd.f32 %v106, %v71
    %v108 = vrot.slane %v107, 4
    %v109 = vadd.f32 %v107, %v108
    %v110 = vrot.slane %v109, 2
    %v111 = vadd.f32 %v109, %v110
    %v112 = vrot.slane %v111, 1
    %v113 = vadd.f32 %v111, %v112
    %v114 = vadd.f32 %v72, %v74
    %v115 = vadd.f32 %v114, %v76
    %v116 = vadd.f32 %v115, %v78
    %v117 = vadd.f32 %v116, %v80
    %v118 = vadd.f32 %v117, %v82
    %v119 = vadd.f32 %v118, %v84
    %v120 = vadd.f32 %v119, %v86
    %v121 = vrot.slane %v120, 4
    %v122 = vadd.f32 %v120, %v121
    %v123 = vrot.slane %v122, 2
    %v124 = vadd.f32 %v122, %v123
    %v125 = vrot.slane %v124, 1
    %v126 = vadd.f32 %v124, %v125
    %v127 = vadd.f32 %v73, %v75
    %v128 = vadd.f32 %v127, %v77
    %v129 = vadd.f32 %v128, %v79
    %v130 = vadd.f32 %v129, %v81
    %v131 = vadd.f32 %v130, %v83
    %v132 = vadd.f32 %v131, %v85
    %v133 = vadd.f32 %v132, %v87
    %v134 = vrot.slane %v133, 4
    %v135 = vadd.f32 %v133, %v134
    %v136 = vrot.slane %v135, 2
    %v137 = vadd.f32 %v135, %v136
    %v138 = vrot.slane %v137, 1
    %v139 = vadd.f32 %v137, %v138
    %v140 = vrcp.pop 64.0
    %v141 = vmul.f32 %v100, %v140
    %v142 = vmul.f32 %v113, %v140
    %v143 = vmul.f32 %v126, %v140
    %v144 = vmul.f32 %v139, %v140
    %v145 = vsub.f32 %v56, %v141
    %v146 = vsub.f32 %v57, %v142
    %v147 = vsub.f32 %v58, %v141
    %v148 = vsub.f32 %v59, %v142
    %v149 = vsub.f32 %v60, %v141
    %v150 = vsub.f32 %v61, %v142
    %v151 = vsub.f32 %v62, %v141
    %v152 = vsub.f32 %v63, %v142
    %v153 = vsub.f32 %v64, %v141
    %v154 = vsub.f32 %v65, %v142
    %v155 = vsub.f32 %v66, %v141
    %v156 = vsub.f32 %v67, %v142
    %v157 = vsub.f32 %v68, %v141
    %v158 = vsub.f32 %v69, %v142
    %v159 = vsub.f32 %v70, %v141
    %v160 = vsub.f32 %v71, %v142
    %v161 = vsub.f32 %v72, %v143
    %v162 = vsub.f32 %v73, %v144
    %v163 = vsub.f32 %v74, %v143
    %v164 = vsub.f32 %v75, %v144
    %v165 = vsub.f32 %v76, %v143
    %v166 = vsub.f32 %v77, %v144
    %v167 = vsub.f32 %v78, %v143
    %v168 = vsub.f32 %v79, %v144
    %v169 = vsub.f32 %v80, %v143
    %v170 = vsub.f32 %v81, %v144
    %v171 = vsub.f32 %v82, %v143
    %v172 = vsub.f32 %v83, %v144
    %v173 = vsub.f32 %v84, %v143
    %v174 = vsub.f32 %v85, %v144
    %v175 = vsub.f32 %v86, %v143
    %v176 = vsub.f32 %v87, %v144
    %v177 = vmul.f32 %v145, %v145
    %v178 = vmul.f32 %v146, %v146
    %v179 = vmul.f32 %v147, %v147
    %v180 = vmul.f32 %v148, %v148
    %v181 = vmul.f32 %v149, %v149
    %v182 = vmul.f32 %v150, %v150
    %v183 = vmul.f32 %v151, %v151
    %v184 = vmul.f32 %v152, %v152
    %v185 = vmul.f32 %v153, %v153
    %v186 = vmul.f32 %v154, %v154
    %v187 = vmul.f32 %v155, %v155
    %v188 = vmul.f32 %v156, %v156
    %v189 = vmul.f32 %v157, %v157
    %v190 = vmul.f32 %v158, %v158
    %v191 = vmul.f32 %v159, %v159
    %v192 = vmul.f32 %v160, %v160
    %v193 = vmul.f32 %v161, %v161
    %v194 = vmul.f32 %v162, %v162
    %v195 = vmul.f32 %v163, %v163
    %v196 = vmul.f32 %v164, %v164
    %v197 = vmul.f32 %v165, %v165
    %v198 = vmul.f32 %v166, %v166
    %v199 = vmul.f32 %v167, %v167
    %v200 = vmul.f32 %v168, %v168
    %v201 = vmul.f32 %v169, %v169
    %v202 = vmul.f32 %v170, %v170
    %v203 = vmul.f32 %v171, %v171
    %v204 = vmul.f32 %v172, %v172
    %v205 = vmul.f32 %v173, %v173
    %v206 = vmul.f32 %v174, %v174
    %v207 = vmul.f32 %v175, %v175
    %v208 = vmul.f32 %v176, %v176
    %v209 = vadd.f32 %v177, %v179
    %v210 = vadd.f32 %v209, %v181
    %v211 = vadd.f32 %v210, %v183
    %v212 = vadd.f32 %v211, %v185
    %v213 = vadd.f32 %v212, %v187
    %v214 = vadd.f32 %v213, %v189
    %v215 = vadd.f32 %v214, %v191
    %v216 = vrot.slane %v215, 4
    %v217 = vadd.f32 %v215, %v216
    %v218 = vrot.slane %v217, 2
    %v219 = vadd.f32 %v217, %v218
    %v220 = vrot.slane %v219, 1
    %v221 = vadd.f32 %v219, %v220
    %v222 = vadd.f32 %v178, %v180
    %v223 = vadd.f32 %v222, %v182
    %v224 = vadd.f32 %v223, %v184
    %v225 = vadd.f32 %v224, %v186
    %v226 = vadd.f32 %v225, %v188
    %v227 = vadd.f32 %v226, %v190
    %v228 = vadd.f32 %v227, %v192
    %v229 = vrot.slane %v228, 4
    %v230 = vadd.f32 %v228, %v229
    %v231 = vrot.slane %v230, 2
    %v232 = vadd.f32 %v230, %v231
    %v233 = vrot.slane %v232, 1
    %v234 = vadd.f32 %v232, %v233
    %v235 = vadd.f32 %v193, %v195
    %v236 = vadd.f32 %v235, %v197
    %v237 = vadd.f32 %v236, %v199
    %v238 = vadd.f32 %v237, %v201
    %v239 = vadd.f32 %v238, %v203
    %v240 = vadd.f32 %v239, %v205
    %v241 = vadd.f32 %v240, %v207
    %v242 = vrot.slane %v241, 4
    %v243 = vadd.f32 %v241, %v242
    %v244 = vrot.slane %v243, 2
    %v245 = vadd.f32 %v243, %v244
    %v246 = vrot.slane %v245, 1
    %v247 = vadd.f32 %v245, %v246
    %v248 = vadd.f32 %v194, %v196
    %v249 = vadd.f32 %v248, %v198
    %v250 = vadd.f32 %v249, %v200
    %v251 = vadd.f32 %v250, %v202
    %v252 = vadd.f32 %v251, %v204
    %v253 = vadd.f32 %v252, %v206
    %v254 = vadd.f32 %v253, %v208
    %v255 = vrot.slane %v254, 4
    %v256 = vadd.f32 %v254, %v255
    %v257 = vrot.slane %v256, 2
    %v258 = vadd.f32 %v256, %v257
    %v259 = vrot.slane %v258, 1
    %v260 = vadd.f32 %v258, %v259
    %v261 = vmul.f32 %v221, %v140
    %v262 = vmul.f32 %v234, %v140
    %v263 = vmul.f32 %v247, %v140
    %v264 = vmul.f32 %v260, %v140
    %v265 = vadd.f32 %v261, 1e-06
    %v266 = vadd.f32 %v262, 1e-06
    %v267 = vadd.f32 %v263, 1e-06
    %v268 = vadd.f32 %v264, 1e-06
    %v269 = vrsqrt.pop %v265
    %v270 = vrsqrt.pop %v266
    %v271 = vrsqrt.pop %v267
    %v272 = vrsqrt.pop %v268
    %v273 = vmul.f32 %v145, %v269
    %v274 = vmul.f32 %v146, %v270
    %v275 = vmul.f32 %v147, %v269
    %v276 = vmul.f32 %v148, %v270
    %v277 = vmul.f32 %v149, %v269
    %v278 = vmul.f32 %v150, %v270
    %v279 = vmul.f32 %v151, %v269
    %v280 = vmul.f32 %v152, %v270
    %v281 = vmul.f32 %v153, %v269
    %v282 = vmul.f32 %v154, %v270
    %v283 = vmul.f32 %v155, %v269
    %v284 = vmul.f32 %v156, %v270
    %v285 = vmul.f32 %v157, %v269
    %v286 = vmul.f32 %v158, %v270
    %v287 = vmul.f32 %v159, %v269
    %v288 = vmul.f32 %v160, %v270
    %v289 = vmul.f32 %v161, %v271
    %v290 = vmul.f32 %v162, %v272
    %v291 = vmul.f32 %v163, %v271
    %v292 = vmul.f32 %v164, %v272
    %v293 = vmul.f32 %v165, %v271
    %v294 = vmul.f32 %v166, %v272
    %v295 = vmul.f32 %v167, %v271
    %v296 = vmul.f32 %v168, %v272
    %v297 = vmul.f32 %v169, %v271
    %v298 = vmul.f32 %v170, %v272
    %v299 = vmul.f32 %v171, %v271
    %v300 = vmul.f32 %v172, %v272
    %v301 = vmul.f32 %v173, %v271
    %v302 = vmul.f32 %v174, %v272
    %v303 = vmul.f32 %v175, %v271
    %v304 = vmul.f32 %v176, %v272
    %v305 = vld [vmem:[#allocation5] sm:$0xff]
    %v306 = vld [vmem:[#allocation5 + $0x8] sm:$0xff]
    %v307 = vld [vmem:[#allocation5 + $0x10] sm:$0xff]
    %v308 = vld [vmem:[#allocation5 + $0x18] sm:$0xff]
    %v309 = vld [vmem:[#allocation5 + $0x20] sm:$0xff]
    %v310 = vld [vmem:[#allocation5 + $0x28] sm:$0xff]
    %v311 = vld [vmem:[#allocation5 + $0x30] sm:$0xff]
    %v312 = vld [vmem:[#allocation5 + $0x38] sm:$0xff]
    %v313 = vld [vmem:[#allocation5 + $0x40] sm:$0xff]
    %v314 = vld [vmem:[#allocation5 + $0x48] sm:$0xff]
    %v315 = vld [vmem:[#allocation5 + $0x50] sm:$0xff]
    %v316 = vld [vmem:[#allocation5 + $0x58] sm:$0xff]
    %v317 = vld [vmem:[#allocation5 + $0x60] sm:$0xff]
    %v318 = vld [vmem:[#allocation5 + $0x68] sm:$0xff]
    %v319 = vld [vmem:[#allocation5 + $0x70] sm:$0xff]
    %v320 = vld [vmem:[#allocation5 + $0x78] sm:$0xff]
    %v321 = vld [vmem:[#allocation7] sm:$0xff]
    %v322 = vld [vmem:[#allocation7 + $0x8] sm:$0xff]
    %v323 = vld [vmem:[#allocation7 + $0x10] sm:$0xff]
    %v324 = vld [vmem:[#allocation7 + $0x18] sm:$0xff]
    %v325 = vld [vmem:[#allocation7 + $0x20] sm:$0xff]
    %v326 = vld [vmem:[#allocation7 + $0x28] sm:$0xff]
    %v327 = vld [vmem:[#allocation7 + $0x30] sm:$0xff]
    %v328 = vld [vmem:[#allocation7 + $0x38] sm:$0xff]
    %v329 = vld [vmem:[#allocation7 + $0x40] sm:$0xff]
    %v330 = vld [vmem:[#allocation7 + $0x48] sm:$0xff]
    %v331 = vld [vmem:[#allocation7 + $0x50] sm:$0xff]
    %v332 = vld [vmem:[#allocation7 + $0x58] sm:$0xff]
    %v333 = vld [vmem:[#allocation7 + $0x60] sm:$0xff]
    %v334 = vld [vmem:[#allocation7 + $0x68] sm:$0xff]
    %v335 = vld [vmem:[#allocation7 + $0x70] sm:$0xff]
    %v336 = vld [vmem:[#allocation7 + $0x78] sm:$0xff]
    %v337 = vmul.f32 %v305, %v273
    %v338 = vmul.f32 %v306, %v274
    %v339 = vmul.f32 %v307, %v275
    %v340 = vmul.f32 %v308, %v276
    %v341 = vmul.f32 %v309, %v277
    %v342 = vmul.f32 %v310, %v278
    %v343 = vmul.f32 %v311, %v279
    %v344 = vmul.f32 %v312, %v280
    %v345 = vmul.f32 %v313, %v281
    %v346 = vmul.f32 %v314, %v282
    %v347 = vmul.f32 %v315, %v283
    %v348 = vmul.f32 %v316, %v284
    %v349 = vmul.f32 %v317, %v285
    %v350 = vmul.f32 %v318, %v286
    %v351 = vmul.f32 %v319, %v287
    %v352 = vmul.f32 %v320, %v288
    %v353 = vmul.f32 %v305, %v289
    %v354 = vmul.f32 %v306, %v290
    %v355 = vmul.f32 %v307, %v291
    %v356 = vmul.f32 %v308, %v292
    %v357 = vmul.f32 %v309, %v293
    %v358 = vmul.f32 %v310, %v294
    %v359 = vmul.f32 %v311, %v295
    %v360 = vmul.f32 %v312, %v296
    %v361 = vmul.f32 %v313, %v297
    %v362 = vmul.f32 %v314, %v298
    %v363 = vmul.f32 %v315, %v299
    %v364 = vmul.f32 %v316, %v300
    %v365 = vmul.f32 %v317, %v301
    %v366 = vmul.f32 %v318, %v302
    %v367 = vmul.f32 %v319, %v303
    %v368 = vmul.f32 %v320, %v304
    %v369 = vadd.f32 %v337, %v321
    %v370 = vadd.f32 %v338, %v322
    %v371 = vadd.f32 %v339, %v323
    %v372 = vadd.f32 %v340, %v324
    %v373 = vadd.f32 %v341, %v325
    %v374 = vadd.f32 %v342, %v326
    %v375 = vadd.f32 %v343, %v327
    %v376 = vadd.f32 %v344, %v328
    %v377 = vadd.f32 %v345, %v329
    %v378 = vadd.f32 %v346, %v330
    %v379 = vadd.f32 %v347, %v331
    %v380 = vadd.f32 %v348, %v332
    %v381 = vadd.f32 %v349, %v333
    %v382 = vadd.f32 %v350, %v334
    %v383 = vadd.f32 %v351, %v335
    %v384 = vadd.f32 %v352, %v336
    %v385 = vadd.f32 %v353, %v321
    %v386 = vadd.f32 %v354, %v322
    %v387 = vadd.f32 %v355, %v323
    %v388 = vadd.f32 %v356, %v324
    %v389 = vadd.f32 %v357, %v325
    %v390 = vadd.f32 %v358, %v326
    %v391 = vadd.f32 %v359, %v327
    %v392 = vadd.f32 %v360, %v328
    %v393 = vadd.f32 %v361, %v329
    %v394 = vadd.f32 %v362, %v330
    %v395 = vadd.f32 %v363, %v331
    %v396 = vadd.f32 %v364, %v332
    %v397 = vadd.f32 %v365, %v333
    %v398 = vadd.f32 %v366, %v334
    %v399 = vadd.f32 %v367, %v335
    %v400 = vadd.f32 %v368, %v336
    %401 = vst [vmem:[#allocation8] sm:$0xff] %v369
    %402 = vst [vmem:[#allocation8 + $0x8] sm:$0xff] %v370
    %403 = vst [vmem:[#allocation8 + $0x10] sm:$0xff] %v371
    %404 = vst [vmem:[#allocation8 + $0x18] sm:$0xff] %v372
    %405 = vst [vmem:[#allocation8 + $0x20] sm:$0xff] %v373
    %406 = vst [vmem:[#allocation8 + $0x28] sm:$0xff] %v374
    %407 = vst [vmem:[#allocation8 + $0x30] sm:$0xff] %v375
    %408 = vst [vmem:[#allocation8 + $0x38] sm:$0xff] %v376
    %409 = vst [vmem:[#allocation8 + $0x40] sm:$0xff] %v377
    %410 = vst [vmem:[#allocation8 + $0x48] sm:$0xff] %v378
    %411 = vst [vmem:[#allocation8 + $0x50] sm:$0xff] %v379
    %412 = vst [vmem:[#allocation8 + $0x58] sm:$0xff] %v380
    %413 = vst [vmem:[#allocation8 + $0x60] sm:$0xff] %v381
    %414 = vst [vmem:[#allocation8 + $0x68] sm:$0xff] %v382
    %415 = vst [vmem:[#allocation8 + $0x70] sm:$0xff] %v383
    %416 = vst [vmem:[#allocation8 + $0x78] sm:$0xff] %v384
    %417 = vst [vmem:[#allocation8 + $0x80] sm:$0xff] %v385
    %418 = vst [vmem:[#allocation8 + $0x88] sm:$0xff] %v386
    %419 = vst [vmem:[#allocation8 + $0x90] sm:$0xff] %v387
    %420 = vst [vmem:[#allocation8 + $0x98] sm:$0xff] %v388
    %421 = vst [vmem:[#allocation8 + $0xa0] sm:$0xff] %v389
    %422 = vst [vmem:[#allocation8 + $0xa8] sm:$0xff] %v390
    %423 = vst [vmem:[#allocation8 + $0xb0] sm:$0xff] %v391
    %424 = vst [vmem:[#allocation8 + $0xb8] sm:$0xff] %v392
    %425 = vst [vmem:[#allocation8 + $0xc0] sm:$0xff] %v393
    %426 = vst [vmem:[#allocation8 + $0xc8] sm:$0xff] %v394
    %427 = vst [vmem:[#allocation8 + $0xd0] sm:$0xff] %v395
    %428 = vst [vmem:[#allocation8 + $0xd8] sm:$0xff] %v396
    %429 = vst [vmem:[#allocation8 + $0xe0] sm:$0xff] %v397
    %430 = vst [vmem:[#allocation8 + $0xe8] sm:$0xff] %v398
    %431 = vst [vmem:[#allocation8 + $0xf0] sm:$0xff] %v399
    %432 = vst [vmem:[#allocation8 + $0xf8] sm:$0xff] %v400
    // Predicated region
    $region26: #{tpu_custom_call.1} parent=1 // pred_check
      _
    $region27: #{tpu_custom_call.1} parent=1 // pred_check_branch
      %434 = sbr.rel (0) target = $region29
    $region28: #{tpu_custom_call.1} parent=1 // pred_region
      %s436 = ssub.s32 4096, 4096
      %437 = vsyncadd [#allocation4], %s436
      %s438 = sshll.u32 [#allocation8], 4
      %s439 = int_to_ptr.vmem [resolvable:$true] %s438
      %444 = dma.vmem_to_hbm [thread:$0]  %s439, 4096, %s3, [#allocation4], 256, 256, 16
    $region29: #{tpu_custom_call.1} parent=1 // pred_fallthru
      _
    // Predicated region
    $region30: #{tpu_custom_call.1} parent=1 // pred_check
      _
    $region31: #{tpu_custom_call.1} parent=1 // pred_check_branch
      %446 = sbr.rel (0) target = $region33
    $region32: #{tpu_custom_call.1} parent=1 // pred_region
      %447 = dma.done [#allocation4], 4096
    $region33: #{tpu_custom_call.1} parent=1 // pred_fallthru
      _
    %448 = vsyncpa [#allocation3], 1
    %449 = vsyncpa [#allocation6], 1
    %450 = vsyncpa [#allocation4], 1

</llo_original>
